<compile_context>
chip_gen: v5e
topology: v5e:2x2
jax: 0.10.0
libtpu: 0.0.40
codegen_flags: <defaults>
</compile_context>

<pallas_src>
import functools

import jax
import jax.numpy as jnp
from jax.experimental import pallas as pl
from jax.experimental.pallas import tpu as pltpu


def _round_up(x, m):
    return ((x + m - 1) // m) * m


def _cdiv(a, b):
    return -(-a // b)


def _discriminator_kernel(filter_sizes, x_ref, w_ref, b_ref, fcw_ref, colL_ref,
                          out_ref, acc_ref):
    """One batch tile of the TextCNN discriminator forward.

    x_ref   : (S, TB, H)      time-major hidden states
    w_ref   : (fs_max, H, NPc) per-tap packed conv weights (missing taps = 0)
    b_ref   : (1, NPc)        per-column conv bias (+ the 1.0 "fc-bias" column)
    fcw_ref : (1, NPc)        final Linear weights (fc bias folded into a column)
    colL_ref: (1, NPc)        valid conv length per column (S - fs + 1)
    out_ref : (1, TB)         lane-dense per-tile output row
    acc_ref : (L_top, TB, NPc) f32 scratch accumulator
    """
    S, TB, H = x_ref.shape
    fs_max = w_ref.shape[0]
    NPc = w_ref.shape[2]
    L_top = acc_ref.shape[0]                    # = S - min(filter_sizes) + 1

    # ---- per-tap MXU matmuls, accumulated with free time-axis shifts --------
    x0 = x_ref[0:L_top].reshape(L_top * TB, H)
    acc_ref[...] = jnp.dot(
        x0, w_ref[0], preferred_element_type=jnp.float32).reshape(L_top, TB, NPc)
    for k in range(1, fs_max):
        n = min(L_top, S - k)                   # valid positions needing tap k
        xk = x_ref[k:k + n].reshape(n * TB, H)
        yk = jnp.dot(
            xk, w_ref[k], preferred_element_type=jnp.float32).reshape(n, TB, NPc)
        acc_ref[0:n] = acc_ref[0:n] + yk        # full lane width, no lane slices

    # ---- max-pool over each column's valid time range (segmented) -----------
    Ls = sorted({S - fs + 1 for fs in filter_sizes})   # ascending valid lengths
    pooled = jnp.max(acc_ref[0:Ls[0]], axis=0)         # (TB, NPc), valid for all
    prev = Ls[0]
    for Lj in Ls[1:]:
        seg = jnp.max(acc_ref[prev:Lj], axis=0)        # (TB, NPc)
        live = colL_ref[...] >= jnp.float32(Lj)        # (1, NPc) constant mask
        pooled = jnp.maximum(pooled, jnp.where(live, seg, -1e30))
        prev = Lj

    # bias + leaky_relu commute past the max (monotone, per-column constant bias)
    z = pooled + b_ref[...]
    act = jnp.maximum(z, 0.01 * z)                     # F.leaky_relu (slope 0.01)

    # ---- fused Linear: (1,NPc) . (TB,NPc)^T -> lane-dense (1, TB) row --------
    # The fc bias rides on the "always-one" packed column, so no extra add.
    out_row = jax.lax.dot_general(
        fcw_ref[...], act,
        dimension_numbers=(((1,), (1,)), ((), ())),
        preferred_element_type=jnp.float32)
    # TODO(synk): nn.Dropout is identity in eval mode; no stochastic dropout applied.
    out_ref[...] = out_row.astype(out_ref.dtype)


def discriminator_forward(h_sequence, params, filter_sizes, n_filters,
                          batch_tile=None):
    """h_sequence: (seq_len, batch, dim_h) -- PyTorch convention, consumed directly."""
    S, B, H = h_sequence.shape
    F = n_filters
    n_fs = len(filter_sizes)
    fs_max, fs_min = max(filter_sizes), min(filter_sizes)
    assert S >= fs_max, "seq_len must be >= max(filter_sizes)"
    dtype = h_sequence.dtype
    isz = jnp.dtype(dtype).itemsize
    L_top = S - fs_min + 1

    # ---- pack weights once (tiny tensors) -----------------------------------
    # +1 column reserved as an "always-one" column carrying the fc bias.
    NPc = max(128, _round_up(n_fs * F + 1, 128))
    bias_col = n_fs * F

    W = jnp.zeros((fs_max, H, NPc), dtype)          # per-tap slabs, zero for missing taps
    b_all = jnp.zeros((1, NPc), jnp.float32)
    colL = jnp.full((1, NPc), float(L_top), jnp.float32)
    fcw = jnp.zeros((1, NPc), jnp.float32)
    for i, fs in enumerate(filter_sizes):
        c0 = i * F
        W = W.at[:fs, :, c0:c0 + F].set(params[f"conv{i}_w"].astype(dtype))
        b_all = b_all.at[:, c0:c0 + F].set(
            params[f"conv{i}_b"].reshape(1, F).astype(jnp.float32))
        colL = colL.at[:, c0:c0 + F].set(float(S - fs + 1))
        fcw = fcw.at[:, c0:c0 + F].set(
            params["fc_w"][c0:c0 + F, 0].reshape(1, F).astype(jnp.float32))
    # fc bias folded in: conv bias 1.0 -> pooled act == 1.0 -> weight = fc_b.
    b_all = b_all.at[0, bias_col].set(1.0)
    fcw = fcw.at[0, bias_col].set(params["fc_b"].reshape(())[...].astype(jnp.float32))

    # ---- generation-aware tile sizing ---------------------------------------
    try:
        kind = jax.devices()[0].device_kind.lower().replace(" ", "")
    except Exception:
        kind = ""
    is_v7 = ("v7" in kind) or ("tpu7" in kind) or (kind == "")   # unknown -> conservative
    vmem_cap = (64 if is_v7 else 128) << 20
    budget = (44 if is_v7 else 96) << 20                         # headroom under capacity
    sub = {4: 8, 2: 16, 1: 32}.get(isz, 8)                       # dtype-aware sublane pack

    cap = batch_tile if batch_tile is not None else (256 if is_v7 else 512)
    cap = max(sub, _round_up(int(cap), sub))

    # Per-tile VMEM estimate (x double buffer + f32 tap result + accumulator).
    fixed = 2 * fs_max * H * NPc * isz + 16 * NPc * 4 + (1 << 20)
    per_row = 3 * S * H * isz + 4 * L_top * NPc * 4
    tb_fit = max(sub, (max(budget - fixed, per_row) // per_row) // sub * sub)
    cap = min(cap, tb_fit)
    # TODO(synk): for very long S on v7x, add an S-chunk ("arbitrary") grid axis
    # with an (fs_max-1) halo + running max scratch instead of shrinking TB.

    x = h_sequence
    if B < sub:
        # Tiny batch only: pad to one sublane group (cheap).  Large batches are
        # never padded -- partial boundary tiles are handled by the cdiv grid.
        Bp = sub
        x = jnp.pad(x, ((0, 0), (0, Bp - B), (0, 0)))
        TB = sub
    else:
        Bp = B
        TB = min(cap, (B // sub) * sub)
        if is_v7:
            # Ensure >= 2 grid steps so the "parallel" batch axis spans both TCs.
            TB = min(TB, _round_up(_cdiv(B, 2), sub))
        TB = max(TB, sub)
    num_tiles = _cdiv(Bp, TB)

    est = fixed + TB * per_row
    vmem_limit = int(min(max(est, 32 << 20), vmem_cap - (8 << 20)))

    kernel = functools.partial(_discriminator_kernel,
                               tuple(int(f) for f in filter_sizes))
    out = pl.pallas_call(
        kernel,
        out_shape=jax.ShapeDtypeStruct((num_tiles, TB), jnp.float32),
        grid=(num_tiles,),
        in_specs=[
            pl.BlockSpec((S, TB, H), lambda i: (0, i, 0)),        # batch-tiled x stream
            pl.BlockSpec((fs_max, H, NPc), lambda i: (0, 0, 0)),  # resident per-tap weights
            pl.BlockSpec((1, NPc), lambda i: (0, 0)),             # packed conv (+fc) biases
            pl.BlockSpec((1, NPc), lambda i: (0, 0)),             # packed fc weights
            pl.BlockSpec((1, NPc), lambda i: (0, 0)),             # per-column valid length
        ],
        out_specs=pl.BlockSpec((1, TB), lambda i: (i, 0)),        # lane-dense output row
        scratch_shapes=[pltpu.VMEM((L_top, TB, NPc), jnp.float32)],
        compiler_params=pltpu.CompilerParams(
            dimension_semantics=("parallel",),
            vmem_limit_bytes=vmem_limit),
    )(x, W, b_all, fcw, colL)
    return out.reshape(-1)[:B].reshape(B, 1)


def init_params(key, dim_h, n_filters, filter_sizes):
    """Deterministic synthetic parameters (same shapes as the torch module)."""
    params = {}
    keys = jax.random.split(key, 2 * len(filter_sizes) + 2)
    for i, fs in enumerate(filter_sizes):
        # torch Conv2d weight is (n_filters, 1, fs, dim_h); stored here as (fs, dim_h, n_filters)
        params[f"conv{i}_w"] = 0.1 * jax.random.normal(
            keys[2 * i], (fs, dim_h, n_filters), jnp.float32)
        params[f"conv{i}_b"] = 0.1 * jax.random.normal(
            keys[2 * i + 1], (1, n_filters), jnp.float32)
    in_dim = len(filter_sizes) * n_filters
    params["fc_w"] = 0.1 * jax.random.normal(keys[-2], (in_dim, 1), jnp.float32)
    params["fc_b"] = 0.1 * jax.random.normal(keys[-1], (1, 1), jnp.float32)
    return params


def reference_forward(h_sequence, params, filter_sizes):
    """Pure-JAX reference mirroring the PyTorch forward (eval mode)."""
    x = jnp.transpose(h_sequence, (1, 0, 2))
    pooled = []
    for i, fs in enumerate(filter_sizes):
        w, b = params[f"conv{i}_w"], params[f"conv{i}_b"]
        L = x.shape[1] - fs + 1
        acc = sum(jnp.einsum("bld,df->blf", x[:, k:k + L, :], w[k]) for k in range(fs))
        acc = acc + b.reshape(1, 1, -1)
        acc = jnp.where(acc >= 0, acc, 0.01 * acc)
        pooled.append(jnp.max(acc, axis=1))
    cat = jnp.concatenate(pooled, axis=1)
    return cat @ params["fc_w"] + params["fc_b"]


if __name__ == "__main__":
    # Small shapes consistent with the module: h_sequence is (seq_len, batch, dim_h).
    seq_len, batch, dim_h = 8, 2, 32
    n_filters = 8
    filter_sizes = (2, 3, 4)

    key = jax.random.PRNGKey(0)
    k_x, k_p = jax.random.split(key)
    h_sequence = jax.random.normal(k_x, (seq_len, batch, dim_h), jnp.float32)
    params = init_params(k_p, dim_h, n_filters, filter_sizes)

    out = discriminator_forward(h_sequence, params, filter_sizes, n_filters)
    out = jax.block_until_ready(out)

    ref = reference_forward(h_sequence, params, filter_sizes)
    assert out.shape == (batch, 1), out.shape
    assert jnp.allclose(out, ref, atol=1e-4, rtol=1e-4), (out, ref)

    print("KERNEL_OK")
</pallas_src>

<mosaic_0001>
module attributes {stable_mosaic.version = 11 : i64} {
  func.func @_discriminator_kernel(%arg0: i32, %arg1: memref<8x8x32xf32, #tpu.memory_space<vmem>>, %arg2: memref<4x32x128xf32, #tpu.memory_space<vmem>>, %arg3: memref<1x128xf32, #tpu.memory_space<vmem>>, %arg4: memref<1x128xf32, #tpu.memory_space<vmem>>, %arg5: memref<1x128xf32, #tpu.memory_space<vmem>>, %arg6: memref<1x8xf32, #tpu.memory_space<vmem>>, %arg7: memref<7x8x128xf32, #tpu.memory_space<vmem>>) attributes {dimension_semantics = [#tpu.dimension_semantics<parallel>], iteration_bounds = array<i64: 1>, scalar_prefetch = 0 : i64, scratch_operands = 1 : i64, tpu.core_type = #tpu.core_type<tc>, window_params = [{transform_indices = @transform_0, window_bounds = array<i64: 8, 8, 32>}, {pipeline_mode = #tpu.pipeline_mode<synchronous>, transform_indices = @transform_1, window_bounds = array<i64: 4, 32, 128>}, {pipeline_mode = #tpu.pipeline_mode<synchronous>, transform_indices = @transform_2, window_bounds = array<i64: 1, 128>}, {pipeline_mode = #tpu.pipeline_mode<synchronous>, transform_indices = @transform_3, window_bounds = array<i64: 1, 128>}, {pipeline_mode = #tpu.pipeline_mode<synchronous>, transform_indices = @transform_4, window_bounds = array<i64: 1, 128>}, {transform_indices = @transform_5, window_bounds = array<i64: 1, 8>}]} {
    %c0 = arith.constant 0 : index
    %c0_0 = arith.constant 0 : index
    %c0_1 = arith.constant 0 : index
    %0 = vector.load %arg1[%c0, %c0_0, %c0_1] : memref<8x8x32xf32, #tpu.memory_space<vmem>>, vector<7x8x32xf32>
    %1 = vector.shape_cast %0 : vector<7x8x32xf32> to vector<56x32xf32>
    %c0_2 = arith.constant 0 : index
    %c0_3 = arith.constant 0 : index
    %c0_4 = arith.constant 0 : index
    %2 = vector.load %arg2[%c0_2, %c0_3, %c0_4] : memref<4x32x128xf32, #tpu.memory_space<vmem>>, vector<1x32x128xf32>
    %3 = vector.shape_cast %2 : vector<1x32x128xf32> to vector<32x128xf32>
    %cst = arith.constant dense<0.000000e+00> : vector<56x128xf32>
    %4 = tpu.matmul %1, %3, %cst {dimension_numbers = #tpu.dot_dimension_numbers<[1], [0], [0], [1], [0, 0, 1, 1], [], []>} : vector<56x32xf32>, vector<32x128xf32>, vector<56x128xf32> -> vector<56x128xf32>
    %5 = vector.shape_cast %4 : vector<56x128xf32> to vector<7x8x128xf32>
    %c0_5 = arith.constant 0 : index
    %c0_6 = arith.constant 0 : index
    %c0_7 = arith.constant 0 : index
    %6 = vector.load %arg7[%c0_5, %c0_6, %c0_7] : memref<7x8x128xf32, #tpu.memory_space<vmem>>, vector<7x8x128xf32>
    tpu.vector_store %arg7[%c0_5, %c0_6, %c0_7], %5 {strides = array<i32>} : memref<7x8x128xf32, #tpu.memory_space<vmem>>, vector<7x8x128xf32>,
    %c1 = arith.constant 1 : index
    %c0_8 = arith.constant 0 : index
    %c0_9 = arith.constant 0 : index
    %7 = vector.load %arg1[%c1, %c0_8, %c0_9] : memref<8x8x32xf32, #tpu.memory_space<vmem>>, vector<7x8x32xf32>
    %8 = vector.shape_cast %7 : vector<7x8x32xf32> to vector<56x32xf32>
    %c1_10 = arith.constant 1 : index
    %c0_11 = arith.constant 0 : index
    %c0_12 = arith.constant 0 : index
    %9 = vector.load %arg2[%c1_10, %c0_11, %c0_12] : memref<4x32x128xf32, #tpu.memory_space<vmem>>, vector<1x32x128xf32>
    %10 = vector.shape_cast %9 : vector<1x32x128xf32> to vector<32x128xf32>
    %cst_13 = arith.constant dense<0.000000e+00> : vector<56x128xf32>
    %11 = tpu.matmul %8, %10, %cst_13 {dimension_numbers = #tpu.dot_dimension_numbers<[1], [0], [0], [1], [0, 0, 1, 1], [], []>} : vector<56x32xf32>, vector<32x128xf32>, vector<56x128xf32> -> vector<56x128xf32>
    %12 = vector.shape_cast %11 : vector<56x128xf32> to vector<7x8x128xf32>
    %c0_14 = arith.constant 0 : index
    %c0_15 = arith.constant 0 : index
    %c0_16 = arith.constant 0 : index
    %13 = vector.load %arg7[%c0_14, %c0_15, %c0_16] : memref<7x8x128xf32, #tpu.memory_space<vmem>>, vector<7x8x128xf32>
    %14 = arith.addf %13, %12 : vector<7x8x128xf32>
    %c0_17 = arith.constant 0 : index
    %c0_18 = arith.constant 0 : index
    %c0_19 = arith.constant 0 : index
    %15 = vector.load %arg7[%c0_17, %c0_18, %c0_19] : memref<7x8x128xf32, #tpu.memory_space<vmem>>, vector<7x8x128xf32>
    tpu.vector_store %arg7[%c0_17, %c0_18, %c0_19], %14 {strides = array<i32>} : memref<7x8x128xf32, #tpu.memory_space<vmem>>, vector<7x8x128xf32>,
    %c2 = arith.constant 2 : index
    %c0_20 = arith.constant 0 : index
    %c0_21 = arith.constant 0 : index
    %16 = vector.load %arg1[%c2, %c0_20, %c0_21] : memref<8x8x32xf32, #tpu.memory_space<vmem>>, vector<6x8x32xf32>
    %17 = vector.shape_cast %16 : vector<6x8x32xf32> to vector<48x32xf32>
    %c2_22 = arith.constant 2 : index
    %c0_23 = arith.constant 0 : index
    %c0_24 = arith.constant 0 : index
    %18 = vector.load %arg2[%c2_22, %c0_23, %c0_24] : memref<4x32x128xf32, #tpu.memory_space<vmem>>, vector<1x32x128xf32>
    %19 = vector.shape_cast %18 : vector<1x32x128xf32> to vector<32x128xf32>
    %cst_25 = arith.constant dense<0.000000e+00> : vector<48x128xf32>
    %20 = tpu.matmul %17, %19, %cst_25 {dimension_numbers = #tpu.dot_dimension_numbers<[1], [0], [0], [1], [0, 0, 1, 1], [], []>} : vector<48x32xf32>, vector<32x128xf32>, vector<48x128xf32> -> vector<48x128xf32>
    %21 = vector.shape_cast %20 : vector<48x128xf32> to vector<6x8x128xf32>
    %c0_26 = arith.constant 0 : index
    %c0_27 = arith.constant 0 : index
    %c0_28 = arith.constant 0 : index
    %22 = vector.load %arg7[%c0_26, %c0_27, %c0_28] : memref<7x8x128xf32, #tpu.memory_space<vmem>>, vector<6x8x128xf32>
    %23 = arith.addf %22, %21 : vector<6x8x128xf32>
    %c0_29 = arith.constant 0 : index
    %c0_30 = arith.constant 0 : index
    %c0_31 = arith.constant 0 : index
    %24 = vector.load %arg7[%c0_29, %c0_30, %c0_31] : memref<7x8x128xf32, #tpu.memory_space<vmem>>, vector<6x8x128xf32>
    tpu.vector_store %arg7[%c0_29, %c0_30, %c0_31], %23 {strides = array<i32>} : memref<7x8x128xf32, #tpu.memory_space<vmem>>, vector<6x8x128xf32>,
    %c3 = arith.constant 3 : index
    %c0_32 = arith.constant 0 : index
    %c0_33 = arith.constant 0 : index
    %25 = vector.load %arg1[%c3, %c0_32, %c0_33] : memref<8x8x32xf32, #tpu.memory_space<vmem>>, vector<5x8x32xf32>
    %26 = vector.shape_cast %25 : vector<5x8x32xf32> to vector<40x32xf32>
    %c3_34 = arith.constant 3 : index
    %c0_35 = arith.constant 0 : index
    %c0_36 = arith.constant 0 : index
    %27 = vector.load %arg2[%c3_34, %c0_35, %c0_36] : memref<4x32x128xf32, #tpu.memory_space<vmem>>, vector<1x32x128xf32>
    %28 = vector.shape_cast %27 : vector<1x32x128xf32> to vector<32x128xf32>
    %cst_37 = arith.constant dense<0.000000e+00> : vector<40x128xf32>
    %29 = tpu.matmul %26, %28, %cst_37 {dimension_numbers = #tpu.dot_dimension_numbers<[1], [0], [0], [1], [0, 0, 1, 1], [], []>} : vector<40x32xf32>, vector<32x128xf32>, vector<40x128xf32> -> vector<40x128xf32>
    %30 = vector.shape_cast %29 : vector<40x128xf32> to vector<5x8x128xf32>
    %c0_38 = arith.constant 0 : index
    %c0_39 = arith.constant 0 : index
    %c0_40 = arith.constant 0 : index
    %31 = vector.load %arg7[%c0_38, %c0_39, %c0_40] : memref<7x8x128xf32, #tpu.memory_space<vmem>>, vector<5x8x128xf32>
    %32 = arith.addf %31, %30 : vector<5x8x128xf32>
    %c0_41 = arith.constant 0 : index
    %c0_42 = arith.constant 0 : index
    %c0_43 = arith.constant 0 : index
    %33 = vector.load %arg7[%c0_41, %c0_42, %c0_43] : memref<7x8x128xf32, #tpu.memory_space<vmem>>, vector<5x8x128xf32>
    tpu.vector_store %arg7[%c0_41, %c0_42, %c0_43], %32 {strides = array<i32>} : memref<7x8x128xf32, #tpu.memory_space<vmem>>, vector<5x8x128xf32>,
    %c0_44 = arith.constant 0 : index
    %c0_45 = arith.constant 0 : index
    %c0_46 = arith.constant 0 : index
    %34 = vector.load %arg7[%c0_44, %c0_45, %c0_46] : memref<7x8x128xf32, #tpu.memory_space<vmem>>, vector<5x8x128xf32>
    %cst_47 = arith.constant dense<0xFF800000> : vector<8x128xf32>
    %35 = vector.multi_reduction <maximumf>, %34, %cst_47 [0] : vector<5x8x128xf32> to vector<8x128xf32>
    %c5 = arith.constant 5 : index
    %c0_48 = arith.constant 0 : index
    %c0_49 = arith.constant 0 : index
    %36 = vector.load %arg7[%c5, %c0_48, %c0_49] : memref<7x8x128xf32, #tpu.memory_space<vmem>>, vector<1x8x128xf32>
    %cst_50 = arith.constant dense<0xFF800000> : vector<8x128xf32>
    %37 = vector.multi_reduction <maximumf>, %36, %cst_50 [0] : vector<1x8x128xf32> to vector<8x128xf32>
    %c0_51 = arith.constant 0 : index
    %c0_52 = arith.constant 0 : index
    %38 = vector.load %arg5[%c0_51, %c0_52] : memref<1x128xf32, #tpu.memory_space<vmem>>, vector<1x128xf32>
    %cst_53 = arith.constant 6.000000e+00 : f32
    %39 = vector.broadcast %cst_53 : f32 to vector<1x128xf32>
    %40 = arith.cmpf oge, %38, %39 : vector<1x128xf32>
    %cst_54 = arith.constant -1.000000e+30 : f32
    %41 = vector.shape_cast %40 : vector<1x128xi1> to vector<1x128xi1>
    %42 = vector.broadcast %41 : vector<1x128xi1> to vector<8x128xi1>
    %43 = vector.broadcast %cst_54 : f32 to vector<8x128xf32>
    %44 = arith.select %42, %37, %43 : vector<8x128xi1>, vector<8x128xf32>
    %45 = arith.maximumf %35, %44 : vector<8x128xf32>
    %c6 = arith.constant 6 : index
    %c0_55 = arith.constant 0 : index
    %c0_56 = arith.constant 0 : index
    %46 = vector.load %arg7[%c6, %c0_55, %c0_56] : memref<7x8x128xf32, #tpu.memory_space<vmem>>, vector<1x8x128xf32>
    %cst_57 = arith.constant dense<0xFF800000> : vector<8x128xf32>
    %47 = vector.multi_reduction <maximumf>, %46, %cst_57 [0] : vector<1x8x128xf32> to vector<8x128xf32>
    %c0_58 = arith.constant 0 : index
    %c0_59 = arith.constant 0 : index
    %48 = vector.load %arg5[%c0_58, %c0_59] : memref<1x128xf32, #tpu.memory_space<vmem>>, vector<1x128xf32>
    %cst_60 = arith.constant 7.000000e+00 : f32
    %49 = vector.broadcast %cst_60 : f32 to vector<1x128xf32>
    %50 = arith.cmpf oge, %48, %49 : vector<1x128xf32>
    %cst_61 = arith.constant -1.000000e+30 : f32
    %51 = vector.shape_cast %50 : vector<1x128xi1> to vector<1x128xi1>
    %52 = vector.broadcast %51 : vector<1x128xi1> to vector<8x128xi1>
    %53 = vector.broadcast %cst_61 : f32 to vector<8x128xf32>
    %54 = arith.select %52, %47, %53 : vector<8x128xi1>, vector<8x128xf32>
    %55 = arith.maximumf %45, %54 : vector<8x128xf32>
    %c0_62 = arith.constant 0 : index
    %c0_63 = arith.constant 0 : index
    %56 = vector.load %arg3[%c0_62, %c0_63] : memref<1x128xf32, #tpu.memory_space<vmem>>, vector<1x128xf32>
    %57 = vector.broadcast %56 : vector<1x128xf32> to vector<8x128xf32>
    %58 = arith.addf %55, %57 : vector<8x128xf32>
    %cst_64 = arith.constant 0.00999999977 : f32
    %59 = vector.broadcast %cst_64 : f32 to vector<8x128xf32>
    %60 = arith.mulf %59, %58 : vector<8x128xf32>
    %61 = arith.maximumf %58, %60 : vector<8x128xf32>
    %c0_65 = arith.constant 0 : index
    %c0_66 = arith.constant 0 : index
    %62 = vector.load %arg4[%c0_65, %c0_66] : memref<1x128xf32, #tpu.memory_space<vmem>>, vector<1x128xf32>
    %cst_67 = arith.constant dense<0.000000e+00> : vector<1x8xf32>
    %63 = tpu.matmul %62, %61, %cst_67 {dimension_numbers = #tpu.dot_dimension_numbers<[1], [1], [0], [0], [0, 0, 1, 0], [], []>} : vector<1x128xf32>, vector<8x128xf32>, vector<1x8xf32> -> vector<1x8xf32>
    %c0_68 = arith.constant 0 : index
    %c0_69 = arith.constant 0 : index
    %64 = vector.load %arg6[%c0_68, %c0_69] : memref<1x8xf32, #tpu.memory_space<vmem>>, vector<1x8xf32>
    tpu.vector_store %arg6[%c0_68, %c0_69], %63 {strides = array<i32>} : memref<1x8xf32, #tpu.memory_space<vmem>>, vector<1x8xf32>,
    return
  }
  func.func @transform_0(%arg0: i32) -> (i32, i32, i32) {
    %c0_i32 = arith.constant 0 : i32
    %c0_i32_0 = arith.constant 0 : i32
    %c0_i32_1 = arith.constant 0 : i32
    return %c0_i32, %arg0, %c0_i32_0 : i32, i32, i32
  }
  func.func @transform_1(%arg0: i32) -> (i32, i32, i32) {
    %c0_i32 = arith.constant 0 : i32
    %c0_i32_0 = arith.constant 0 : i32
    %c0_i32_1 = arith.constant 0 : i32
    %c0_i32_2 = arith.constant 0 : i32
    return %c0_i32, %c0_i32_0, %c0_i32_1 : i32, i32, i32
  }
  func.func @transform_2(%arg0: i32) -> (i32, i32) {
    %c0_i32 = arith.constant 0 : i32
    %c0_i32_0 = arith.constant 0 : i32
    %c0_i32_1 = arith.constant 0 : i32
    return %c0_i32, %c0_i32_0 : i32, i32
  }
  func.func @transform_3(%arg0: i32) -> (i32, i32) {
    %c0_i32 = arith.constant 0 : i32
    %c0_i32_0 = arith.constant 0 : i32
    %c0_i32_1 = arith.constant 0 : i32
    return %c0_i32, %c0_i32_0 : i32, i32
  }
  func.func @transform_4(%arg0: i32) -> (i32, i32) {
    %c0_i32 = arith.constant 0 : i32
    %c0_i32_0 = arith.constant 0 : i32
    %c0_i32_1 = arith.constant 0 : i32
    return %c0_i32, %c0_i32_0 : i32, i32
  }
  func.func @transform_5(%arg0: i32) -> (i32, i32) {
    %c0_i32 = arith.constant 0 : i32
    %c0_i32_0 = arith.constant 0 : i32
    return %arg0, %c0_i32 : i32, i32
  }
}

</mosaic_0001>

<llo_original>
// kernel: tpu_custom_call.1
$region0: #{tpu_custom_call.1}
  #allocation0 [shape = 'u32[]', space=smem, size = 0x4, offset = 0x4, fixed_abs, tag = 'smem constant byte address 0x4 - core index']
  #allocation1 [shape = 'u32[72,128]{1,0:T(1,128)}', space=vmem, size = 0x9000, scoped, tag = 'internal scratch']
  #allocation2 [shape = 'f32[7,8,128]{2,1,0:T(8,128)}', space=vmem, size = 0x7000, scoped, tag = 'scratch operand']
  %s0 = inlined_call_operand.hbm [shape: f32[8,8,32], index: 0, kind: input, shape index: {}]
  %s1 = inlined_call_operand.hbm [shape: f32[4,32,128], index: 1, kind: input, shape index: {}]
  %s2 = inlined_call_operand.vmem [shape: f32[1,128], index: 2, kind: input, shape index: {}]
  %s3 = inlined_call_operand.vmem [shape: f32[1,128], index: 3, kind: input, shape index: {}]
  %s4 = inlined_call_operand.vmem [shape: f32[1,128], index: 4, kind: input, shape index: {}]
  %s5 = inlined_call_operand.hbm [shape: f32[1,8], index: 5, kind: output, shape index: {}]
  %s6 = sld [smem:[#allocation0]]
  $region38: #{tpu_custom_call.1} parent=0
    _
  %s8 = ssub.s32 1, %s6
  %s9 = scalar_select 0, %s8, %s6
  $region1: #{tpu_custom_call.1} parent=0
    #allocation3 [shape = 'u8[32768]{0}', space=vmem, size = 0x8000, scoped, tag = 'input window, operand 0, single buffered']
    #allocation4 [shape = 's32[1]{0}', space=sflag, size = 0x4, scoped, tag = 'scoped memory for tpu_custom_call.1']
    #allocation5 [shape = 's32[1]{0}', space=sflag, size = 0x4, scoped, tag = 'scoped memory for tpu_custom_call.1']
    #allocation6 [shape = 'u8[65536]{0}', space=vmem, size = 0x10000, scoped, tag = 'input window, operand 1, single buffered']
    #allocation7 [shape = 's32[1]{0}', space=sflag, size = 0x4, scoped, tag = 'scoped memory for tpu_custom_call.1']
    #allocation8 [shape = 'u8[512]{0}', space=vmem, size = 0x400, scoped, tag = 'output window, operand 0, single buffered']
    %10 = vsyncpa [#allocation4], 0
    %11 = vsyncpa [#allocation7], 0
    %12 = vsyncpa [#allocation5], 0
    // Predicated region
    $region2: #{tpu_custom_call.1} parent=1 // pred_check
      _
    $region3: #{tpu_custom_call.1} parent=1 // pred_check_branch
      %14 = sbr.rel (0) target = $region5
    $region4: #{tpu_custom_call.1} parent=1 // pred_region
      %16 = vsyncadd [#allocation4], 0
      %s17 = sshll.u32 %s0, 4
      %s18 = int_to_ptr.hbm [resolvable:$true] %s17
      %s19 = sshll.u32 [#allocation3], 4
      %s20 = int_to_ptr.vmem [resolvable:$true] %s19
      %25 = dma.hbm_to_vmem [thread:$0]  %s18, 1024, %s20, [#allocation4], 128, 128, 8
    $region5: #{tpu_custom_call.1} parent=1 // pred_fallthru
      _
    // Predicated region
    $region6: #{tpu_custom_call.1} parent=1 // pred_check
      _
    $region7: #{tpu_custom_call.1} parent=1 // pred_check_branch
      %27 = sbr.rel (0) target = $region9
    $region8: #{tpu_custom_call.1} parent=1 // pred_region
      %29 = vsyncadd [#allocation7], 0
      %s30 = sshll.u32 %s1, 4
      %s31 = int_to_ptr.hbm [resolvable:$true] %s30
      %s32 = sshll.u32 [#allocation6], 4
      %s33 = int_to_ptr.vmem [resolvable:$true] %s32
      %38 = dma.hbm_to_vmem [thread:$0]  %s31, 2048, %s33, [#allocation7], 128, 128, 8
    $region9: #{tpu_custom_call.1} parent=1 // pred_fallthru
      _
    // Predicated region
    $region10: #{tpu_custom_call.1} parent=1 // pred_check
      _
    $region11: #{tpu_custom_call.1} parent=1 // pred_check_branch
      %40 = sbr.rel (0) target = $region13
    $region12: #{tpu_custom_call.1} parent=1 // pred_region
      _
    $region13: #{tpu_custom_call.1} parent=1 // pred_fallthru
      _
    // Predicated region
    $region14: #{tpu_custom_call.1} parent=1 // pred_check
      _
    $region15: #{tpu_custom_call.1} parent=1 // pred_check_branch
      %42 = sbr.rel (0) target = $region17
    $region16: #{tpu_custom_call.1} parent=1 // pred_region
      _
    $region17: #{tpu_custom_call.1} parent=1 // pred_fallthru
      _
    // Predicated region
    $region18: #{tpu_custom_call.1} parent=1 // pred_check
      _
    $region19: #{tpu_custom_call.1} parent=1 // pred_check_branch
      %44 = sbr.rel (0) target = $region21
    $region20: #{tpu_custom_call.1} parent=1 // pred_region
      _
    $region21: #{tpu_custom_call.1} parent=1 // pred_fallthru
      _
    // Predicated region
    $region22: #{tpu_custom_call.1} parent=1 // pred_check
      _
    $region23: #{tpu_custom_call.1} parent=1 // pred_check_branch
      %46 = sbr.rel (0) target = $region25
    $region24: #{tpu_custom_call.1} parent=1 // pred_region
      %48 = dma.done [#allocation4], 1024
    $region25: #{tpu_custom_call.1} parent=1 // pred_fallthru
      _
    // Predicated region
    $region26: #{tpu_custom_call.1} parent=1 // pred_check
      _
    $region27: #{tpu_custom_call.1} parent=1 // pred_check_branch
      %50 = sbr.rel (0) target = $region29
    $region28: #{tpu_custom_call.1} parent=1 // pred_region
      %52 = dma.done [#allocation7], 2048
    $region29: #{tpu_custom_call.1} parent=1 // pred_fallthru
      _
    %v53 = vld [vmem:[#allocation3] sm:$0xff]
    %v54 = vld [vmem:[#allocation3 + $0x8] sm:$0xff]
    %v55 = vld [vmem:[#allocation3 + $0x10] sm:$0xff]
    %v56 = vld [vmem:[#allocation3 + $0x18] sm:$0xff]
    %v57 = vld [vmem:[#allocation3 + $0x20] sm:$0xff]
    %v58 = vld [vmem:[#allocation3 + $0x28] sm:$0xff]
    %v59 = vld [vmem:[#allocation3 + $0x30] sm:$0xff]
    %v60 = vld [vmem:[#allocation6] sm:$0xff]
    %v61 = vld [vmem:[#allocation6 + $0x8] sm:$0xff]
    %v62 = vld [vmem:[#allocation6 + $0x10] sm:$0xff]
    %v63 = vld [vmem:[#allocation6 + $0x18] sm:$0xff]
    %vm64 = vcmask 261120
    %v66 = vsel %vm64, %v53, 0
    %v69 = vsel %vm64, %v54, 0
    %v72 = vsel %vm64, %v55, 0
    %v75 = vsel %vm64, %v56, 0
    %v78 = vsel %vm64, %v57, 0
    %v81 = vsel %vm64, %v58, 0
    %v84 = vsel %vm64, %v59, 0
    %86 = vmatpush.msra.mxu0 0.0
    %87 = vmatpush.msra.mxu0 0.0
    %88 = vmatpush.msra.mxu0 0.0
    %89 = vmatpush.msra.mxu0 0.0
    %90 = vmatpush.msra.mxu0 0.0
    %91 = vmatpush.msra.mxu0 0.0
    %92 = vmatpush.msra.mxu0 0.0
    %93 = vmatpush.msra.mxu0 0.0
    %94 = vmatpush.msra.mxu0 0.0
    %95 = vmatpush.msra.mxu0 0.0
    %96 = vmatpush.msra.mxu0 0.0
    %97 = vmatpush.msra.mxu0 0.0
    %98 = vmatpush.msra.mxu0 %v63
    %99 = vmatpush.msra.mxu0 %v62
    %100 = vmatpush.msra.mxu0 %v61
    %101 = vmatpush.msra.mxu0 %v60
    %102 = vmatmul.f32.gmra.mxu0 %v66
    %v103 = vpop.f32.mrf.mxu0
    %v104 = vadd.f32 0.0, %v103
    %105 = vmatmul.f32.gmra.mxu0 %v69
    %v106 = vpop.f32.mrf.mxu0
    %v107 = vadd.f32 0.0, %v106
    %108 = vmatmul.f32.gmra.mxu0 %v72
    %v109 = vpop.f32.mrf.mxu0
    %v110 = vadd.f32 0.0, %v109
    %111 = vmatmul.f32.gmra.mxu0 %v75
    %v112 = vpop.f32.mrf.mxu0
    %v113 = vadd.f32 0.0, %v112
    %114 = vmatmul.f32.gmra.mxu0 %v78
    %v115 = vpop.f32.mrf.mxu0
    %v116 = vadd.f32 0.0, %v115
    %117 = vmatmul.f32.gmra.mxu0 %v81
    %v118 = vpop.f32.mrf.mxu0
    %v119 = vadd.f32 0.0, %v118
    %120 = vmatmul.f32.gmra.mxu0 %v84
    %v121 = vpop.f32.mrf.mxu0
    %v122 = vadd.f32 0.0, %v121
    %123 = vdwg.mxu0
    %124 = vst [vmem:[#allocation2] sm:$0xff] %v104
    %125 = vst [vmem:[#allocation2 + $0x8] sm:$0xff] %v107
    %126 = vst [vmem:[#allocation2 + $0x10] sm:$0xff] %v110
    %127 = vst [vmem:[#allocation2 + $0x18] sm:$0xff] %v113
    %128 = vst [vmem:[#allocation2 + $0x20] sm:$0xff] %v116
    %129 = vst [vmem:[#allocation2 + $0x28] sm:$0xff] %v119
    %130 = vst [vmem:[#allocation2 + $0x30] sm:$0xff] %v122
    %s131 = scalar_lea.vmem [#allocation3], 8
    %v132 = vld [vmem:[%s131] sm:$0xff]
    %v133 = vld [vmem:[%s131 + $0x8] sm:$0xff]
    %v134 = vld [vmem:[%s131 + $0x10] sm:$0xff]
    %v135 = vld [vmem:[%s131 + $0x18] sm:$0xff]
    %v136 = vld [vmem:[%s131 + $0x20] sm:$0xff]
    %v137 = vld [vmem:[%s131 + $0x28] sm:$0xff]
    %v138 = vld [vmem:[%s131 + $0x30] sm:$0xff]
    %s139 = scalar_lea.vmem [#allocation6], 32
    %v140 = vld [vmem:[%s139] sm:$0xff]
    %v141 = vld [vmem:[%s139 + $0x8] sm:$0xff]
    %v142 = vld [vmem:[%s139 + $0x10] sm:$0xff]
    %v143 = vld [vmem:[%s139 + $0x18] sm:$0xff]
    %v145 = vsel %vm64, %v132, 0
    %v148 = vsel %vm64, %v133, 0
    %v151 = vsel %vm64, %v134, 0
    %v154 = vsel %vm64, %v135, 0
    %v157 = vsel %vm64, %v136, 0
    %v160 = vsel %vm64, %v137, 0
    %v163 = vsel %vm64, %v138, 0
    %165 = vmatpush.msra.mxu0 0.0
    %166 = vmatpush.msra.mxu0 0.0
    %167 = vmatpush.msra.mxu0 0.0
    %168 = vmatpush.msra.mxu0 0.0
    %169 = vmatpush.msra.mxu0 0.0
    %170 = vmatpush.msra.mxu0 0.0
    %171 = vmatpush.msra.mxu0 0.0
    %172 = vmatpush.msra.mxu0 0.0
    %173 = vmatpush.msra.mxu0 0.0
    %174 = vmatpush.msra.mxu0 0.0
    %175 = vmatpush.msra.mxu0 0.0
    %176 = vmatpush.msra.mxu0 0.0
    %177 = vmatpush.msra.mxu0 %v143
    %178 = vmatpush.msra.mxu0 %v142
    %179 = vmatpush.msra.mxu0 %v141
    %180 = vmatpush.msra.mxu0 %v140
    %181 = vmatmul.f32.gmra.mxu0 %v145
    %v182 = vpop.f32.mrf.mxu0
    %v183 = vadd.f32 0.0, %v182
    %184 = vmatmul.f32.gmra.mxu0 %v148
    %v185 = vpop.f32.mrf.mxu0
    %v186 = vadd.f32 0.0, %v185
    %187 = vmatmul.f32.gmra.mxu0 %v151
    %v188 = vpop.f32.mrf.mxu0
    %v189 = vadd.f32 0.0, %v188
    %190 = vmatmul.f32.gmra.mxu0 %v154
    %v191 = vpop.f32.mrf.mxu0
    %v192 = vadd.f32 0.0, %v191
    %193 = vmatmul.f32.gmra.mxu0 %v157
    %v194 = vpop.f32.mrf.mxu0
    %v195 = vadd.f32 0.0, %v194
    %196 = vmatmul.f32.gmra.mxu0 %v160
    %v197 = vpop.f32.mrf.mxu0
    %v198 = vadd.f32 0.0, %v197
    %199 = vmatmul.f32.gmra.mxu0 %v163
    %v200 = vpop.f32.mrf.mxu0
    %v201 = vadd.f32 0.0, %v200
    %202 = vdwg.mxu0
    %v203 = vld [vmem:[#allocation2] sm:$0xff]
    %v204 = vld [vmem:[#allocation2 + $0x8] sm:$0xff]
    %v205 = vld [vmem:[#allocation2 + $0x10] sm:$0xff]
    %v206 = vld [vmem:[#allocation2 + $0x18] sm:$0xff]
    %v207 = vld [vmem:[#allocation2 + $0x20] sm:$0xff]
    %v208 = vld [vmem:[#allocation2 + $0x28] sm:$0xff]
    %v209 = vld [vmem:[#allocation2 + $0x30] sm:$0xff]
    %v210 = vadd.f32 %v203, %v183
    %v211 = vadd.f32 %v204, %v186
    %v212 = vadd.f32 %v205, %v189
    %v213 = vadd.f32 %v206, %v192
    %v214 = vadd.f32 %v207, %v195
    %v215 = vadd.f32 %v208, %v198
    %v216 = vadd.f32 %v209, %v201
    %217 = vst [vmem:[#allocation2] sm:$0xff] %v210
    %218 = vst [vmem:[#allocation2 + $0x8] sm:$0xff] %v211
    %219 = vst [vmem:[#allocation2 + $0x10] sm:$0xff] %v212
    %220 = vst [vmem:[#allocation2 + $0x18] sm:$0xff] %v213
    %221 = vst [vmem:[#allocation2 + $0x20] sm:$0xff] %v214
    %222 = vst [vmem:[#allocation2 + $0x28] sm:$0xff] %v215
    %223 = vst [vmem:[#allocation2 + $0x30] sm:$0xff] %v216
    %s224 = scalar_lea.vmem [#allocation3], 16
    %v225 = vld [vmem:[%s224] sm:$0xff]
    %v226 = vld [vmem:[%s224 + $0x8] sm:$0xff]
    %v227 = vld [vmem:[%s224 + $0x10] sm:$0xff]
    %v228 = vld [vmem:[%s224 + $0x18] sm:$0xff]
    %v229 = vld [vmem:[%s224 + $0x20] sm:$0xff]
    %v230 = vld [vmem:[%s224 + $0x28] sm:$0xff]
    %s231 = scalar_lea.vmem [#allocation6], 64
    %v232 = vld [vmem:[%s231] sm:$0xff]
    %v233 = vld [vmem:[%s231 + $0x8] sm:$0xff]
    %v234 = vld [vmem:[%s231 + $0x10] sm:$0xff]
    %v235 = vld [vmem:[%s231 + $0x18] sm:$0xff]
    %v237 = vsel %vm64, %v225, 0
    %v240 = vsel %vm64, %v226, 0
    %v243 = vsel %vm64, %v227, 0
    %v246 = vsel %vm64, %v228, 0
    %v249 = vsel %vm64, %v229, 0
    %v252 = vsel %vm64, %v230, 0
    %254 = vmatpush.msra.mxu0 0.0
    %255 = vmatpush.msra.mxu0 0.0
    %256 = vmatpush.msra.mxu0 0.0
    %257 = vmatpush.msra.mxu0 0.0
    %258 = vmatpush.msra.mxu0 0.0
    %259 = vmatpush.msra.mxu0 0.0
    %260 = vmatpush.msra.mxu0 0.0
    %261 = vmatpush.msra.mxu0 0.0
    %262 = vmatpush.msra.mxu0 0.0
    %263 = vmatpush.msra.mxu0 0.0
    %264 = vmatpush.msra.mxu0 0.0
    %265 = vmatpush.msra.mxu0 0.0
    %266 = vmatpush.msra.mxu0 %v235
    %267 = vmatpush.msra.mxu0 %v234
    %268 = vmatpush.msra.mxu0 %v233
    %269 = vmatpush.msra.mxu0 %v232
    %270 = vmatmul.f32.gmra.mxu0 %v237
    %v271 = vpop.f32.mrf.mxu0
    %v272 = vadd.f32 0.0, %v271
    %273 = vmatmul.f32.gmra.mxu0 %v240
    %v274 = vpop.f32.mrf.mxu0
    %v275 = vadd.f32 0.0, %v274
    %276 = vmatmul.f32.gmra.mxu0 %v243
    %v277 = vpop.f32.mrf.mxu0
    %v278 = vadd.f32 0.0, %v277
    %279 = vmatmul.f32.gmra.mxu0 %v246
    %v280 = vpop.f32.mrf.mxu0
    %v281 = vadd.f32 0.0, %v280
    %282 = vmatmul.f32.gmra.mxu0 %v249
    %v283 = vpop.f32.mrf.mxu0
    %v284 = vadd.f32 0.0, %v283
    %285 = vmatmul.f32.gmra.mxu0 %v252
    %v286 = vpop.f32.mrf.mxu0
    %v287 = vadd.f32 0.0, %v286
    %288 = vdwg.mxu0
    %v289 = vld [vmem:[#allocation2] sm:$0xff]
    %v290 = vld [vmem:[#allocation2 + $0x8] sm:$0xff]
    %v291 = vld [vmem:[#allocation2 + $0x10] sm:$0xff]
    %v292 = vld [vmem:[#allocation2 + $0x18] sm:$0xff]
    %v293 = vld [vmem:[#allocation2 + $0x20] sm:$0xff]
    %v294 = vld [vmem:[#allocation2 + $0x28] sm:$0xff]
    %v295 = vadd.f32 %v289, %v272
    %v296 = vadd.f32 %v290, %v275
    %v297 = vadd.f32 %v291, %v278
    %v298 = vadd.f32 %v292, %v281
    %v299 = vadd.f32 %v293, %v284
    %v300 = vadd.f32 %v294, %v287
    %301 = vst [vmem:[#allocation2] sm:$0xff] %v295
    %302 = vst [vmem:[#allocation2 + $0x8] sm:$0xff] %v296
    %303 = vst [vmem:[#allocation2 + $0x10] sm:$0xff] %v297
    %304 = vst [vmem:[#allocation2 + $0x18] sm:$0xff] %v298
    %305 = vst [vmem:[#allocation2 + $0x20] sm:$0xff] %v299
    %306 = vst [vmem:[#allocation2 + $0x28] sm:$0xff] %v300
    %s307 = scalar_lea.vmem [#allocation3], 24
    %v308 = vld [vmem:[%s307] sm:$0xff]
    %v309 = vld [vmem:[%s307 + $0x8] sm:$0xff]
    %v310 = vld [vmem:[%s307 + $0x10] sm:$0xff]
    %v311 = vld [vmem:[%s307 + $0x18] sm:$0xff]
    %v312 = vld [vmem:[%s307 + $0x20] sm:$0xff]
    %s313 = scalar_lea.vmem [#allocation6], 96
    %v314 = vld [vmem:[%s313] sm:$0xff]
    %v315 = vld [vmem:[%s313 + $0x8] sm:$0xff]
    %v316 = vld [vmem:[%s313 + $0x10] sm:$0xff]
    %v317 = vld [vmem:[%s313 + $0x18] sm:$0xff]
    %v319 = vsel %vm64, %v308, 0
    %v322 = vsel %vm64, %v309, 0
    %v325 = vsel %vm64, %v310, 0
    %v328 = vsel %vm64, %v311, 0
    %v331 = vsel %vm64, %v312, 0
    %333 = vmatpush.msra.mxu0 0.0
    %334 = vmatpush.msra.mxu0 0.0
    %335 = vmatpush.msra.mxu0 0.0
    %336 = vmatpush.msra.mxu0 0.0
    %337 = vmatpush.msra.mxu0 0.0
    %338 = vmatpush.msra.mxu0 0.0
    %339 = vmatpush.msra.mxu0 0.0
    %340 = vmatpush.msra.mxu0 0.0
    %341 = vmatpush.msra.mxu0 0.0
    %342 = vmatpush.msra.mxu0 0.0
    %343 = vmatpush.msra.mxu0 0.0
    %344 = vmatpush.msra.mxu0 0.0
    %345 = vmatpush.msra.mxu0 %v317
    %346 = vmatpush.msra.mxu0 %v316
    %347 = vmatpush.msra.mxu0 %v315
    %348 = vmatpush.msra.mxu0 %v314
    %349 = vmatmul.f32.gmra.mxu0 %v319
    %v350 = vpop.f32.mrf.mxu0
    %v351 = vadd.f32 0.0, %v350
    %352 = vmatmul.f32.gmra.mxu0 %v322
    %v353 = vpop.f32.mrf.mxu0
    %v354 = vadd.f32 0.0, %v353
    %355 = vmatmul.f32.gmra.mxu0 %v325
    %v356 = vpop.f32.mrf.mxu0
    %v357 = vadd.f32 0.0, %v356
    %358 = vmatmul.f32.gmra.mxu0 %v328
    %v359 = vpop.f32.mrf.mxu0
    %v360 = vadd.f32 0.0, %v359
    %361 = vmatmul.f32.gmra.mxu0 %v331
    %v362 = vpop.f32.mrf.mxu0
    %v363 = vadd.f32 0.0, %v362
    %364 = vdwg.mxu0
    %v365 = vld [vmem:[#allocation2] sm:$0xff]
    %v366 = vld [vmem:[#allocation2 + $0x8] sm:$0xff]
    %v367 = vld [vmem:[#allocation2 + $0x10] sm:$0xff]
    %v368 = vld [vmem:[#allocation2 + $0x18] sm:$0xff]
    %v369 = vld [vmem:[#allocation2 + $0x20] sm:$0xff]
    %v370 = vadd.f32 %v365, %v351
    %v371 = vadd.f32 %v366, %v354
    %v372 = vadd.f32 %v367, %v357
    %v373 = vadd.f32 %v368, %v360
    %v374 = vadd.f32 %v369, %v363
    %375 = vst [vmem:[#allocation2] sm:$0xff] %v370
    %376 = vst [vmem:[#allocation2 + $0x8] sm:$0xff] %v371
    %377 = vst [vmem:[#allocation2 + $0x10] sm:$0xff] %v372
    %378 = vst [vmem:[#allocation2 + $0x18] sm:$0xff] %v373
    %379 = vst [vmem:[#allocation2 + $0x20] sm:$0xff] %v374
    %v380 = vld [vmem:[#allocation2] sm:$0xff]
    %v381 = vld [vmem:[#allocation2 + $0x8] sm:$0xff]
    %v382 = vld [vmem:[#allocation2 + $0x10] sm:$0xff]
    %v383 = vld [vmem:[#allocation2 + $0x18] sm:$0xff]
    %v384 = vld [vmem:[#allocation2 + $0x20] sm:$0xff]
    %v385 = vmax.f32 %v380, %v384
    %v386 = vmax.f32 %v385, %v381
    %v387 = vmax.f32 %v382, %v383
    %v388 = vmax.f32 %v386, %v387
    %s389 = scalar_lea.vmem [#allocation2], 40
    %v390 = vld [vmem:[%s389] sm:$0xff]
    %v391 = vld [vmem:[%s4] sm:$0x1]
    %vm392 = vcmp.ge.f32.partialorder %v391, 6.0
    %v393 = vsel %vm392, 1, 0
    %v394 = vperm.slane %v393, 0
    %vm395 = vcmp.eq.s32.totalorder %v394, 1
    %v396 = vsel %vm395, %v390, -1e+30
    %v397 = vmax.f32 %v388, %v396
    %s398 = scalar_lea.vmem [#allocation2], 48
    %v399 = vld [vmem:[%s398] sm:$0xff]
    %vm400 = vcmp.ge.f32.partialorder %v391, 7.0
    %v401 = vsel %vm400, 1, 0
    %v402 = vperm.slane %v401, 0
    %vm403 = vcmp.eq.s32.totalorder %v402, 1
    %v404 = vsel %vm403, %v399, -1e+30
    %v405 = vmax.f32 %v397, %v404
    %v406 = vld [vmem:[%s2] sm:$0x1]
    %v408 = vperm.slane %v406, 0
    %v410 = vadd.f32 %v405, %v408
    %v411 = vmul.f32 %v410, 0.01
    %v412 = vmax.f32 %v410, %v411
    %v413 = vld [vmem:[%s3] sm:$0x1]
    %414 = vmatpush.xpose.msra.mxu0 0.0
    %415 = vmatpush.xpose.msra.mxu0 0.0
    %416 = vmatpush.xpose.msra.mxu0 0.0
    %417 = vmatpush.xpose.msra.mxu0 0.0
    %418 = vmatpush.xpose.msra.mxu0 0.0
    %419 = vmatpush.xpose.msra.mxu0 0.0
    %420 = vmatpush.xpose.msra.mxu0 0.0
    %421 = vmatpush.xpose.msra.mxu0 0.0
    %422 = vmatpush.xpose.msra.mxu0 0.0
    %423 = vmatpush.xpose.msra.mxu0 0.0
    %424 = vmatpush.xpose.msra.mxu0 0.0
    %425 = vmatpush.xpose.msra.mxu0 0.0
    %426 = vmatpush.xpose.msra.mxu0 0.0
    %427 = vmatpush.xpose.msra.mxu0 0.0
    %428 = vmatpush.xpose.msra.mxu0 0.0
    %429 = vmatpush.xpose.msra.mxu0 %v412
    %430 = vmatmul.f32.gmra.mxu0 %v413
    %v431 = vpop.f32.mrf.mxu0
    %v432 = vadd.f32 0.0, %v431
    %433 = vdwg.mxu0
    %vm434 = vcmask 57344
    %435 = vst.msk [vmem:[#allocation8] sm:$0x1] %vm434, %v432
    // Predicated region
    $region30: #{tpu_custom_call.1} parent=1 // pred_check
      _
    $region31: #{tpu_custom_call.1} parent=1 // pred_check_branch
      %437 = sbr.rel (0) target = $region33
    $region32: #{tpu_custom_call.1} parent=1 // pred_region
      %439 = vsyncadd [#allocation5], 0
      %s441 = sshll.u32 [#allocation8], 4
      %s442 = int_to_ptr.vmem [resolvable:$true] %s441
      %s443 = sshll.u32 %s5, 4
      %s444 = int_to_ptr.hbm [resolvable:$true] %s443
      %446 = dma.vmem_to_hbm [thread:$0]  %s442, 16, %s444, [#allocation5]
    $region33: #{tpu_custom_call.1} parent=1 // pred_fallthru
      _
    // Predicated region
    $region34: #{tpu_custom_call.1} parent=1 // pred_check
      _
    $region35: #{tpu_custom_call.1} parent=1 // pred_check_branch
      %448 = sbr.rel (0) target = $region37
    $region36: #{tpu_custom_call.1} parent=1 // pred_region
      %450 = dma.done [#allocation5], 16
    $region37: #{tpu_custom_call.1} parent=1 // pred_fallthru
      _
    %451 = vsyncpa [#allocation4], 1
    %452 = vsyncpa [#allocation7], 1
    %453 = vsyncpa [#allocation5], 1

</llo_original>
